<compile_context>
chip_gen: v7x
topology: tpu7x:2x2x1
jax: 0.10.0
libtpu: 0.0.40
codegen_flags: <defaults>
</compile_context>

<pallas_src>
import functools

import jax
import jax.numpy as jnp
from jax.experimental import pallas as pl
from jax.experimental.pallas import tpu as pltpu

_LANES = 128


def _sublane_align(dtype):
    # Packed-sublane tiling: f32 -> 8, bf16/f16 -> 16, int8/fp8 -> 32 rows.
    bits = jnp.dtype(dtype).itemsize * 8
    return max(8, 256 // bits)


def _max_row_tile():
    # v7x (3.2 TB/s HBM): 8192 rows = 4 MiB/input block amortizes the ~0.35 us
    # per-step overhead.  v5e/v6e: 4096 rows = 2 MiB/input block sits on the
    # measured ~85% HBM-roofline plateau and stays modest in VMEM.
    try:
        kind = jax.devices()[0].device_kind.lower()
    except Exception:  # pragma: no cover
        kind = ""
    return 8192 if "v7" in kind else 4096


def _bce_elem(x, t, from_logits, binary_targets):
    """Per-element BCE, matching torch binary_cross_entropy (log clamp -100)."""
    p = jax.nn.sigmoid(x) if from_logits else x
    # TODO(synk): a logit-domain BCE (max(x,0)-x*t+log1p(exp(-|x|))) uses 1
    # transcendental/elem instead of 3, but differs slightly from torch's
    # sigmoid + clamp(-100) reference, so the reference form is kept.
    if binary_targets:
        # Exact only for t in {0,1}: one log instead of two (EUP relief).
        p_sel = jnp.where(t >= 0.5, p, 1.0 - p)
        return -jnp.maximum(jnp.log(p_sel), -100.0)
    log_p = jnp.maximum(jnp.log(p), -100.0)
    log_1mp = jnp.maximum(jnp.log(1.0 - p), -100.0)
    return -(t * log_p + (1.0 - t) * log_1mp)


def _focal_partial_kernel(x_ref, t_ref, out_ref, acc_ref, *, rows, row_tile,
                          num_blocks, blocks_per_slice, n_slices, from_logits,
                          binary_targets):
    s = pl.program_id(0)          # slice: "parallel" -> splits across TCs
    k = pl.program_id(1)          # step within slice: reduction axis

    @pl.when(k == 0)
    def _():
        acc_ref[...] = jnp.zeros_like(acc_ref)

    x = x_ref[...].astype(jnp.float32)
    t = t_ref[...].astype(jnp.float32)
    bce = _bce_elem(x, t, from_logits, binary_targets)

    def accum(v):
        # vreg-shaped (8,128) lane-parallel accumulation: pure VPU adds.  The
        # single cross-lane reduce + focal transform happen once, in the
        # wrapper epilogue.
        acc_ref[...] += v.reshape(row_tile // 8, 8, _LANES).sum(axis=0)

    always_full = (rows % row_tile == 0) and (n_slices * blocks_per_slice == num_blocks)
    if always_full:
        # Hot path (typical NCHW sizes): no iota / mask / select at all.
        accum(bce)
    else:
        block_idx = s * blocks_per_slice + k              # logical, unclamped
        valid_rows = rows - block_idx * row_tile           # <=0 for dup blocks

        @pl.when(valid_rows >= row_tile)
        def _():
            accum(bce)

        @pl.when(jnp.logical_and(valid_rows > 0, valid_rows < row_tile))
        def _():
            rid = jax.lax.broadcasted_iota(jnp.int32, (row_tile, _LANES), 0)
            accum(jnp.where(rid < valid_rows, bce, 0.0))

    @pl.when(k == blocks_per_slice - 1)
    def _():
        out_ref[0] = acc_ref[...]


def focal_loss(inputs, targets, *, alpha=0.8, gamma=2, smooth=1,
               from_logits=False, binary_targets=False):
    """Pallas TPU implementation of FocalLoss.forward. Returns a scalar f32."""
    del smooth  # unused by the reference forward as well
    total_n = inputs.size
    assert targets.size == total_n and total_n > 0

    x_flat = inputs.reshape(-1)
    t_flat = targets.reshape(-1)

    # Alignment respecting packed layout of both operand dtypes; no upcast and
    # no padded copy of the full array.
    align_rows = max(_sublane_align(x_flat.dtype), _sublane_align(t_flat.dtype))
    align_elems = align_rows * _LANES
    n_main = (total_n // align_elems) * align_elems

    partial_sum = jnp.float32(0.0)

    if n_main:
        rows = n_main // _LANES
        x2 = x_flat[:n_main].reshape(rows, _LANES)
        t2 = t_flat[:n_main].reshape(rows, _LANES)

        row_tile = min(_max_row_tile(), rows)
        num_blocks = pl.cdiv(rows, row_tile)
        n_slices = 2 if num_blocks >= 2 else 1
        blocks_per_slice = pl.cdiv(num_blocks, n_slices)

        kernel = functools.partial(
            _focal_partial_kernel,
            rows=rows, row_tile=row_tile, num_blocks=num_blocks,
            blocks_per_slice=blocks_per_slice, n_slices=n_slices,
            from_logits=bool(from_logits), binary_targets=bool(binary_targets))

        def in_map(s, k):
            # Clamp so a (rare) overhang step never indexes past the array;
            # the kernel's scalar guard skips its contribution entirely.
            return (jnp.minimum(s * blocks_per_slice + k, num_blocks - 1), 0)

        # VMEM budget: 2 inputs x 2 pipeline buffers (native dtype) plus f32
        # elementwise temporaries, with headroom; capped well under physical.
        block_elems = row_tile * _LANES
        pipeline_bytes = 2 * block_elems * (x_flat.dtype.itemsize
                                            + t_flat.dtype.itemsize)
        vmem_limit = min(pipeline_bytes + 6 * block_elems * 4 + (2 << 20),
                         48 << 20)
        vmem_limit = max(vmem_limit, 16 << 20)

        partials = pl.pallas_call(
            kernel,
            out_shape=jax.ShapeDtypeStruct((n_slices, 8, _LANES), jnp.float32),
            grid_spec=pltpu.PrefetchScalarGridSpec(
                num_scalar_prefetch=0,
                grid=(n_slices, blocks_per_slice),
                in_specs=[pl.BlockSpec((row_tile, _LANES), in_map),
                          pl.BlockSpec((row_tile, _LANES), in_map)],
                out_specs=pl.BlockSpec((1, 8, _LANES), lambda s, k: (s, 0, 0)),
                scratch_shapes=[pltpu.VMEM((8, _LANES), jnp.float32)]),
            compiler_params=pltpu.CompilerParams(
                dimension_semantics=("parallel", "arbitrary"),
                vmem_limit_bytes=int(vmem_limit)),
        )(x2, t2)

        partial_sum = jnp.sum(partials)   # tiny (n_slices*8*128) epilogue

    if n_main < total_n:
        # < align_elems leftover elements: fold in with plain JAX instead of
        # materializing a padded copy of the whole tensor.
        x_tail = x_flat[n_main:].astype(jnp.float32)
        t_tail = t_flat[n_main:].astype(jnp.float32)
        partial_sum = partial_sum + jnp.sum(
            _bce_elem(x_tail, t_tail, bool(from_logits), bool(binary_targets)))

    bce = partial_sum / jnp.float32(total_n)
    return jnp.float32(alpha) * (1.0 - jnp.exp(-bce)) ** gamma * bce


def _focal_loss_ref(inputs, targets, alpha=0.8, gamma=2, from_logits=False):
    p = jax.nn.sigmoid(inputs) if from_logits else inputs
    p = p.reshape(-1).astype(jnp.float32)
    t = targets.reshape(-1).astype(jnp.float32)
    log_p = jnp.maximum(jnp.log(p), -100.0)
    log_1mp = jnp.maximum(jnp.log(1.0 - p), -100.0)
    bce = jnp.mean(-(t * log_p + (1.0 - t) * log_1mp))
    return alpha * (1.0 - jnp.exp(-bce)) ** gamma * bce


if __name__ == "__main__":
    key = jax.random.PRNGKey(0)
    k1, k2 = jax.random.split(key)

    # NCHW inputs: batch=2, channels=4, spatial=16x16.
    shape = (2, 4, 16, 16)
    # from_logits=False (module default) => inputs are probabilities.
    inputs = jax.random.uniform(k1, shape, dtype=jnp.float32,
                                minval=0.01, maxval=0.99)
    targets = (jax.random.uniform(k2, shape) > 0.5).astype(jnp.float32)

    out = focal_loss(inputs, targets, alpha=0.8, gamma=2, smooth=1,
                     from_logits=False)
    out = jax.block_until_ready(out)

    ref = _focal_loss_ref(inputs, targets)
    assert jnp.allclose(out, ref, rtol=1e-5, atol=1e-5), (out, ref)

    print("KERNEL_OK")
</pallas_src>

<mosaic_0001>
module attributes {stable_mosaic.version = 11 : i64} {
  func.func @_focal_partial_kernel(%arg0: i32, %arg1: i32, %arg2: memref<16x128xf32, #tpu.memory_space<vmem>>, %arg3: memref<16x128xf32, #tpu.memory_space<vmem>>, %arg4: memref<1x8x128xf32, #tpu.memory_space<vmem>>, %arg5: memref<8x128xf32, #tpu.memory_space<vmem>>) attributes {dimension_semantics = [#tpu.dimension_semantics<parallel>, #tpu.dimension_semantics<arbitrary>], iteration_bounds = array<i64: 1, 1>, scalar_prefetch = 0 : i64, scratch_operands = 1 : i64, tpu.core_type = #tpu.core_type<tc>, window_params = [{transform_indices = @transform_0, window_bounds = array<i64: 16, 128>}, {transform_indices = @transform_1, window_bounds = array<i64: 16, 128>}, {transform_indices = @transform_2, window_bounds = array<i64: 1, 8, 128>}]} {
    %c0_i32 = arith.constant 0 : i32
    %0 = arith.cmpi eq, %arg1, %c0_i32 : i32
    %1 = arith.extui %0 : i1 to i32
    %c0_i32_0 = arith.constant 0 : i32
    %2 = arith.cmpi ne, %1, %c0_i32_0 : i32
    scf.if %2 {
      %cst_15 = arith.constant 0.000000e+00 : f32
      %28 = vector.broadcast %cst_15 : f32 to vector<8x128xf32>
      %c0_16 = arith.constant 0 : index
      %c0_17 = arith.constant 0 : index
      %29 = vector.load %arg5[%c0_16, %c0_17] : memref<8x128xf32, #tpu.memory_space<vmem>>, vector<8x128xf32>
      tpu.vector_store %arg5[%c0_16, %c0_17], %28 {strides = array<i32>} : memref<8x128xf32, #tpu.memory_space<vmem>>, vector<8x128xf32>,
    } else {
    }
    %c0 = arith.constant 0 : index
    %c0_1 = arith.constant 0 : index
    %3 = vector.load %arg2[%c0, %c0_1] : memref<16x128xf32, #tpu.memory_space<vmem>>, vector<16x128xf32>
    %c0_2 = arith.constant 0 : index
    %c0_3 = arith.constant 0 : index
    %4 = vector.load %arg3[%c0_2, %c0_3] : memref<16x128xf32, #tpu.memory_space<vmem>>, vector<16x128xf32>
    %5 = math.log %3 : vector<16x128xf32>
    %cst = arith.constant -1.000000e+02 : f32
    %6 = vector.broadcast %cst : f32 to vector<16x128xf32>
    %7 = arith.maximumf %5, %6 : vector<16x128xf32>
    %cst_4 = arith.constant 1.000000e+00 : f32
    %8 = vector.broadcast %cst_4 : f32 to vector<16x128xf32>
    %9 = arith.subf %8, %3 : vector<16x128xf32>
    %10 = math.log %9 : vector<16x128xf32>
    %cst_5 = arith.constant -1.000000e+02 : f32
    %11 = vector.broadcast %cst_5 : f32 to vector<16x128xf32>
    %12 = arith.maximumf %10, %11 : vector<16x128xf32>
    %13 = arith.mulf %4, %7 : vector<16x128xf32>
    %cst_6 = arith.constant 1.000000e+00 : f32
    %14 = vector.broadcast %cst_6 : f32 to vector<16x128xf32>
    %15 = arith.subf %14, %4 : vector<16x128xf32>
    %16 = arith.mulf %15, %12 : vector<16x128xf32>
    %17 = arith.addf %13, %16 : vector<16x128xf32>
    %cst_7 = arith.constant 0.000000e+00 : f32
    %18 = vector.broadcast %cst_7 : f32 to vector<16x128xf32>
    %19 = arith.subf %18, %17 : vector<16x128xf32>
    %c0_8 = arith.constant 0 : index
    %c0_9 = arith.constant 0 : index
    %20 = vector.load %arg5[%c0_8, %c0_9] : memref<8x128xf32, #tpu.memory_space<vmem>>, vector<8x128xf32>
    %21 = vector.shape_cast %19 : vector<16x128xf32> to vector<2x8x128xf32>
    %cst_10 = arith.constant dense<0.000000e+00> : vector<8x128xf32>
    %22 = vector.multi_reduction <add>, %21, %cst_10 [0] : vector<2x8x128xf32> to vector<8x128xf32>
    %23 = arith.addf %20, %22 : vector<8x128xf32>
    %c0_11 = arith.constant 0 : index
    %c0_12 = arith.constant 0 : index
    %24 = vector.load %arg5[%c0_11, %c0_12] : memref<8x128xf32, #tpu.memory_space<vmem>>, vector<8x128xf32>
    tpu.vector_store %arg5[%c0_11, %c0_12], %23 {strides = array<i32>} : memref<8x128xf32, #tpu.memory_space<vmem>>, vector<8x128xf32>,
    %c0_i32_13 = arith.constant 0 : i32
    %25 = arith.cmpi eq, %arg1, %c0_i32_13 : i32
    %26 = arith.extui %25 : i1 to i32
    %c0_i32_14 = arith.constant 0 : i32
    %27 = arith.cmpi ne, %26, %c0_i32_14 : i32
    scf.if %27 {
      %c0_15 = arith.constant 0 : index
      %c0_16 = arith.constant 0 : index
      %28 = vector.load %arg5[%c0_15, %c0_16] : memref<8x128xf32, #tpu.memory_space<vmem>>, vector<8x128xf32>
      %c0_17 = arith.constant 0 : index
      %c0_18 = arith.constant 0 : index
      %c0_19 = arith.constant 0 : index
      %29 = vector.load %arg4[%c0_17, %c0_18, %c0_19] : memref<1x8x128xf32, #tpu.memory_space<vmem>>, vector<1x8x128xf32>
      %30 = vector.shape_cast %29 : vector<1x8x128xf32> to vector<8x128xf32>
      %31 = vector.shape_cast %28 : vector<8x128xf32> to vector<1x8x128xf32>
      tpu.vector_store %arg4[%c0_17, %c0_18, %c0_19], %31 {strides = array<i32>} : memref<1x8x128xf32, #tpu.memory_space<vmem>>, vector<1x8x128xf32>,
    } else {
    }
    return
  }
  func.func @transform_0(%arg0: i32, %arg1: i32) -> (i32, i32) {
    %c1_i32 = arith.constant 1 : i32
    %0 = arith.muli %arg0, %c1_i32 : i32
    %1 = arith.addi %0, %arg1 : i32
    %c0_i32 = arith.constant 0 : i32
    %2 = arith.minsi %1, %c0_i32 : i32
    %c0_i32_0 = arith.constant 0 : i32
    %c0_i32_1 = arith.constant 0 : i32
    return %2, %c0_i32_0 : i32, i32
  }
  func.func @transform_1(%arg0: i32, %arg1: i32) -> (i32, i32) {
    %c1_i32 = arith.constant 1 : i32
    %0 = arith.muli %arg0, %c1_i32 : i32
    %1 = arith.addi %0, %arg1 : i32
    %c0_i32 = arith.constant 0 : i32
    %2 = arith.minsi %1, %c0_i32 : i32
    %c0_i32_0 = arith.constant 0 : i32
    %c0_i32_1 = arith.constant 0 : i32
    return %2, %c0_i32_0 : i32, i32
  }
  func.func @transform_2(%arg0: i32, %arg1: i32) -> (i32, i32, i32) {
    %c0_i32 = arith.constant 0 : i32
    %c0_i32_0 = arith.constant 0 : i32
    %c0_i32_1 = arith.constant 0 : i32
    return %arg0, %c0_i32, %c0_i32_0 : i32, i32, i32
  }
}

</mosaic_0001>

<llo_original>
// kernel: tpu_custom_call.1
$region0: #{tpu_custom_call.1}
  #allocation0 [shape = 'u32[]', space=smem, size = 0x4, offset = 0x4, fixed_abs, tag = 'smem constant byte address 0x4 - core index']
  #allocation1 [shape = 'u32[144,128]{1,0:T(1,128)}', space=vmem, size = 0x12000, scoped, tag = 'internal scratch']
  #allocation2 [shape = 'f32[8,128]{1,0:T(8,128)}', space=vmem, size = 0x1000, scoped, tag = 'scratch operand']
  %s0 = inlined_call_operand.hbm [shape: f32[16,128], index: 0, kind: input, shape index: {}]
  %s1 = inlined_call_operand.hbm [shape: f32[16,128], index: 1, kind: input, shape index: {}]
  %s2 = inlined_call_operand.hbm [shape: f32[1,8,128], index: 2, kind: output, shape index: {}]
  %s3 = sld [smem:[#allocation0]]
  $region34: #{tpu_custom_call.1} parent=0
    _
  %s5 = ssub.s32 1, %s3
  %s6 = scalar_select 0, %s5, %s3
  $region1: #{tpu_custom_call.1} parent=0
    #allocation3 [shape = 'u8[8192]{0}', space=vmem, size = 0x2000, scoped, tag = 'input window, operand 0, single buffered']
    #allocation4 [shape = 's32[1]{0}', space=sflag, size = 0x4, scoped, tag = 'scoped memory for tpu_custom_call.1']
    #allocation5 [shape = 's32[1]{0}', space=sflag, size = 0x4, scoped, tag = 'scoped memory for tpu_custom_call.1']
    #allocation6 [shape = 'u8[8192]{0}', space=vmem, size = 0x2000, scoped, tag = 'input window, operand 1, single buffered']
    #allocation7 [shape = 's32[1]{0}', space=sflag, size = 0x4, scoped, tag = 'scoped memory for tpu_custom_call.1']
    #allocation8 [shape = 'u8[4096]{0}', space=vmem, size = 0x1000, scoped, tag = 'output window, operand 0, single buffered']
    %7 = vsyncpa [#allocation4], 0
    %8 = vsyncpa [#allocation7], 0
    %9 = vsyncpa [#allocation5], 0
    // Predicated region
    $region2: #{tpu_custom_call.1} parent=1 // pred_check
      _
    $region3: #{tpu_custom_call.1} parent=1 // pred_check_branch
      %11 = sbr.rel (0) target = $region5
    $region4: #{tpu_custom_call.1} parent=1 // pred_region
      %s12 = sadd.s32 0, 0
      %p13 = scmp.lt.s32.totalorder %s12, 0
      %s14 = scalar_select %p13, %s12, 0
      %s15 = smul.u32 2, %s14
      %s17 = ssub.s32 256, 256
      %18 = vsyncadd [#allocation4], %s17
      %s19 = smul.addr %s15, 128
      %s20 = scalar_lea.hbm %s0, %s19
      %s21 = sshll.u32 [#allocation3], 4
      %s22 = int_to_ptr.vmem [resolvable:$true] %s21
      %27 = dma.hbm_to_vmem [thread:$0]  %s20, 256, %s22, [#allocation4], 128, 128, 8
    $region5: #{tpu_custom_call.1} parent=1 // pred_fallthru
      _
    // Predicated region
    $region6: #{tpu_custom_call.1} parent=1 // pred_check
      _
    $region7: #{tpu_custom_call.1} parent=1 // pred_check_branch
      %29 = sbr.rel (0) target = $region9
    $region8: #{tpu_custom_call.1} parent=1 // pred_region
      %s30 = sadd.s32 0, 0
      %p31 = scmp.lt.s32.totalorder %s30, 0
      %s32 = scalar_select %p31, %s30, 0
      %s33 = smul.u32 2, %s32
      %s35 = ssub.s32 256, 256
      %36 = vsyncadd [#allocation7], %s35
      %s37 = smul.addr %s33, 128
      %s38 = scalar_lea.hbm %s1, %s37
      %s39 = sshll.u32 [#allocation6], 4
      %s40 = int_to_ptr.vmem [resolvable:$true] %s39
      %45 = dma.hbm_to_vmem [thread:$0]  %s38, 256, %s40, [#allocation7], 128, 128, 8
    $region9: #{tpu_custom_call.1} parent=1 // pred_fallthru
      _
    // Predicated region
    $region10: #{tpu_custom_call.1} parent=1 // pred_check
      _
    $region11: #{tpu_custom_call.1} parent=1 // pred_check_branch
      %47 = sbr.rel (0) target = $region13
    $region12: #{tpu_custom_call.1} parent=1 // pred_region
      %48 = dma.done [#allocation4], 256
    $region13: #{tpu_custom_call.1} parent=1 // pred_fallthru
      _
    // Predicated region
    $region14: #{tpu_custom_call.1} parent=1 // pred_check
      _
    $region15: #{tpu_custom_call.1} parent=1 // pred_check_branch
      %50 = sbr.rel (0) target = $region17
    $region16: #{tpu_custom_call.1} parent=1 // pred_region
      %51 = dma.done [#allocation7], 256
    $region17: #{tpu_custom_call.1} parent=1 // pred_fallthru
      _
    %s52 = sadd.s32 0, 0
    %p53 = scmp.lt.s32.totalorder %s52, 0
    %s54 = scalar_select %p53, %s52, 0
    %s55 = smul.u32 2, %s54
    %s56 = sadd.s32 0, 0
    %p57 = scmp.lt.s32.totalorder %s56, 0
    %s58 = scalar_select %p57, %s56, 0
    %s59 = smul.u32 2, %s58
    %p60 = scmp.eq.s32.totalorder 0, 0
    // Predicated region
    $region18: #{tpu_custom_call.1} parent=1 // pred_check
      %p61 = pneg %p60
    $region19: #{tpu_custom_call.1} parent=1 // pred_check_branch
      %63 = sbr.rel (%p61) target = $region21
    $region20: #{tpu_custom_call.1} parent=1 // pred_region
      %64 = vst [vmem:[#allocation2] sm:$0xff] 0.0
    $region21: #{tpu_custom_call.1} parent=1 // pred_fallthru
      _
    %v65 = vld [vmem:[#allocation3] sm:$0xff]
    %v66 = vld [vmem:[#allocation3 + $0x8] sm:$0xff]
    %v67 = vld [vmem:[#allocation6] sm:$0xff]
    %v68 = vld [vmem:[#allocation6 + $0x8] sm:$0xff]
    %v69 = vlog2.pop %v65
    %v70 = vmul.f32 %v69, 0.6931472
    %v71 = vlog2.pop %v66
    %v72 = vmul.f32 %v71, 0.6931472
    %v73 = vmax.f32 %v70, -100.0
    %v74 = vmax.f32 %v72, -100.0
    %v75 = vsub.f32 1.0, %v65
    %v76 = vsub.f32 1.0, %v66
    %v77 = vlog2.pop %v75
    %v78 = vmul.f32 %v77, 0.6931472
    %v79 = vlog2.pop %v76
    %v80 = vmul.f32 %v79, 0.6931472
    %v81 = vmax.f32 %v78, -100.0
    %v82 = vmax.f32 %v80, -100.0
    %v83 = vmul.f32 %v67, %v73
    %v84 = vmul.f32 %v68, %v74
    %v85 = vsub.f32 1.0, %v67
    %v86 = vsub.f32 1.0, %v68
    %v87 = vmul.f32 %v85, %v81
    %v88 = vmul.f32 %v86, %v82
    %v89 = vadd.f32 %v83, %v87
    %v90 = vadd.f32 %v84, %v88
    %v91 = vsub.f32 0.0, %v89
    %v92 = vsub.f32 0.0, %v90
    %v93 = vld [vmem:[#allocation2] sm:$0xff]
    %v94 = vadd.f32 %v91, %v92
    %v95 = vadd.f32 %v93, %v94
    %96 = vst [vmem:[#allocation2] sm:$0xff] %v95
    // Predicated region
    $region22: #{tpu_custom_call.1} parent=1 // pred_check
      %p97 = pneg %p60
    $region23: #{tpu_custom_call.1} parent=1 // pred_check_branch
      %99 = sbr.rel (%p97) target = $region25
    $region24: #{tpu_custom_call.1} parent=1 // pred_region
      %v100 = vld [vmem:[#allocation2] sm:$0xff]
      %101 = vst [vmem:[#allocation8] sm:$0xff] %v100
    $region25: #{tpu_custom_call.1} parent=1 // pred_fallthru
      _
    // Predicated region
    $region26: #{tpu_custom_call.1} parent=1 // pred_check
      _
    $region27: #{tpu_custom_call.1} parent=1 // pred_check_branch
      %103 = sbr.rel (0) target = $region29
    $region28: #{tpu_custom_call.1} parent=1 // pred_region
      %s105 = ssub.s32 128, 128
      %106 = vsyncadd [#allocation5], %s105
      %s108 = sshll.u32 [#allocation8], 4
      %s109 = int_to_ptr.vmem [resolvable:$true] %s108
      %111 = dma.vmem_to_hbm [thread:$0]  %s109, 128, %s2, [#allocation5]
    $region29: #{tpu_custom_call.1} parent=1 // pred_fallthru
      _
    // Predicated region
    $region30: #{tpu_custom_call.1} parent=1 // pred_check
      _
    $region31: #{tpu_custom_call.1} parent=1 // pred_check_branch
      %113 = sbr.rel (0) target = $region33
    $region32: #{tpu_custom_call.1} parent=1 // pred_region
      %114 = dma.done [#allocation5], 128
    $region33: #{tpu_custom_call.1} parent=1 // pred_fallthru
      _
    %115 = vsyncpa [#allocation4], 1
    %116 = vsyncpa [#allocation7], 1
    %117 = vsyncpa [#allocation5], 1

</llo_original>
